<compile_context>
chip_gen: v7x
topology: tpu7x:2x2x1
jax: 0.10.0
libtpu: 0.0.40
codegen_flags: <defaults>
</compile_context>

<pallas_src>
import math

import jax
import jax.numpy as jnp
from jax.experimental import pallas as pl
from jax.experimental.pallas import tpu as pltpu

_LANE = 128


def _round_up(x, m):
    return ((x + m - 1) // m) * m


def _sublane(dtype):
    """Packed sublane count for the second-to-last dim of a vreg."""
    return {1: 32, 2: 16, 4: 8}.get(jnp.dtype(dtype).itemsize, 8)


def _pick_tile(padded_dim, align, cap):
    """Largest multiple of `align` that divides `padded_dim` and is <= cap."""
    cap = max(align, min(cap, padded_dim))
    best = align
    for t in range(align, cap + 1, align):
        if padded_dim % t == 0:
            best = t
    return best


def _vmem_capacity_bytes():
    """Physical VMEM of the current chip (conservative fallback)."""
    try:
        info = pltpu.get_tpu_info()
        cap = getattr(info, "vmem_capacity_bytes", None)
        if cap:
            return int(cap)
    except Exception:
        pass
    return 64 * 1024 * 1024  # v7x-sized fallback


# --------------------------------------------------------------------------
# Kernels
# --------------------------------------------------------------------------
def _linear_kernel(x_ref, w_ref, b_ref, o_ref):
    """Single-K-step tile: out = x @ w + b (no accumulator scratch)."""
    acc = jnp.dot(x_ref[...], w_ref[...], preferred_element_type=jnp.float32)
    o_ref[...] = (acc + b_ref[...].astype(jnp.float32)).astype(o_ref.dtype)


def _linear_kacc_kernel(x_ref, w_ref, b_ref, o_ref, acc_ref):
    """K-split tile: f32 accumulator, bias folded into the k==0 init."""
    k = pl.program_id(2)

    @pl.when(k == 0)
    def _():
        acc_ref[...] = jnp.broadcast_to(
            b_ref[...].astype(jnp.float32), acc_ref.shape)

    acc_ref[...] += jnp.dot(
        x_ref[...], w_ref[...], preferred_element_type=jnp.float32)

    @pl.when(k == pl.num_programs(2) - 1)
    def _():
        o_ref[...] = acc_ref[...].astype(o_ref.dtype)


# --------------------------------------------------------------------------
# Parameter preparation (done ONCE at init -- no per-call weight padding)
# --------------------------------------------------------------------------
def prepare_params(w_t, bias, *, compute_dtype=jnp.bfloat16):
    """Pad weight to (Kp, Np) and bias to (1, Np), cast weight to the compute
    dtype. The forward path only ever pads x's (small) M/K dims."""
    in_f, out_f = w_t.shape
    assert bias.shape == (out_f,)
    Kp = _round_up(in_f, _LANE)
    Np = _round_up(out_f, _LANE)
    wp = w_t
    if (Kp, Np) != w_t.shape:
        wp = jnp.pad(w_t, ((0, Kp - in_f), (0, Np - out_f)))
    if compute_dtype is not None:
        wp = wp.astype(compute_dtype)
    bp = bias
    if Np != out_f:
        bp = jnp.pad(bias, (0, Np - out_f))
    bp = bp.reshape(1, Np).astype(jnp.float32)
    return wp, bp


# --------------------------------------------------------------------------
# Forward
# --------------------------------------------------------------------------
def softmax_head_forward(x, w_padded, b_padded, out_features, *,
                         tm=None, tn=None, tk=None,
                         compute_dtype=jnp.bfloat16):
    """Forward of the `Softmax` head (a Linear layer): x @ W^T + b.

    Args:
      x:          (B, in_features)
      w_padded:   (Kp, Np) weight from prepare_params (pre-transposed, padded,
                  already in the compute dtype).
      b_padded:   (1, Np) f32 bias from prepare_params.
      out_features: logical output width (for slicing off N padding).
      tm/tn/tk:   optional max tile sizes (resolved per chip generation).
      compute_dtype: MXU input dtype (bf16 default; None = keep x's dtype).
    Returns:
      (B, out_features) in x's original dtype.
    """
    B, in_f = x.shape
    Kp, Np = w_padded.shape
    out_f = out_features
    out_dtype = x.dtype

    if compute_dtype is not None and x.dtype != compute_dtype:
        x = x.astype(compute_dtype)
    in_item = jnp.dtype(x.dtype).itemsize
    out_item = jnp.dtype(out_dtype).itemsize
    assert w_padded.dtype == x.dtype, "weight must be prepared in compute dtype"

    # Generation-aware VMEM budget & default tile caps.
    vmem_cap = _vmem_capacity_bytes()
    vmem_budget = (3 * vmem_cap) // 4            # ~75% of physical VMEM
    small_vmem = vmem_cap <= 64 * 1024 * 1024    # v7x-class: modest tiles
    if tm is None:
        tm = 256 if small_vmem else 512
    if tn is None:
        tn = 512 if small_vmem else 1024
    if tk is None:
        tk = 512 if small_vmem else 1024

    # Pad only x's M (to the packed-sublane multiple) and K (to the weight's
    # pre-padded Kp). Zero K padding contributes exactly 0 to the dot.
    sub = _sublane(x.dtype)
    Mp = _round_up(B, sub)
    if (Mp, Kp) != x.shape:
        x = jnp.pad(x, ((0, Mp - B), (0, Kp - in_f)))

    # Divisor-based tiles: no waste beyond the (sublane, 128) alignment pad.
    tm = _pick_tile(Mp, sub, tm)

    flops = 2 * Mp * Kp * Np
    weight_bytes = Kp * Np * in_item
    resident_cap = min(8 * 1024 * 1024, vmem_budget // 6)

    if weight_bytes <= resident_cap:
        # ---- Weight-resident fast path: grid over M only, W fetched once.
        grid = (Mp // tm,)
        in_specs = [
            pl.BlockSpec((tm, Kp), lambda i: (i, 0)),
            pl.BlockSpec((Kp, Np), lambda i: (0, 0)),
            pl.BlockSpec((1, Np), lambda i: (0, 0)),
        ]
        out_specs = pl.BlockSpec((tm, Np), lambda i: (i, 0))
        scratch_shapes = []
        kernel = _linear_kernel
        dim_sem = ("parallel",)
        est = 2 * (tm * Kp * in_item + Kp * Np * in_item
                   + Np * 4 + tm * Np * out_item)
    else:
        tn = _pick_tile(Np, _LANE, tn)
        tk = _pick_tile(Kp, _LANE, tk)
        nk = Kp // tk
        if nk == 1:
            # ---- Single K step: no accumulator scratch, 2-D grid.
            grid = (Mp // tm, Np // tn)
            in_specs = [
                pl.BlockSpec((tm, Kp), lambda i, j: (i, 0)),
                pl.BlockSpec((Kp, tn), lambda i, j: (0, j)),
                pl.BlockSpec((1, tn), lambda i, j: (0, j)),
            ]
            out_specs = pl.BlockSpec((tm, tn), lambda i, j: (i, j))
            scratch_shapes = []
            kernel = _linear_kernel
            dim_sem = ("parallel", "parallel")
            est = 2 * (tm * Kp * in_item + Kp * tn * in_item
                       + tn * 4 + tm * tn * out_item)
        else:
            # ---- General K-split path: f32 accumulator, K last ('arbitrary').
            grid = (Mp // tm, Np // tn, nk)
            in_specs = [
                pl.BlockSpec((tm, tk), lambda i, j, k: (i, k)),
                pl.BlockSpec((tk, tn), lambda i, j, k: (k, j)),
                pl.BlockSpec((1, tn), lambda i, j, k: (0, j)),
            ]
            out_specs = pl.BlockSpec((tm, tn), lambda i, j, k: (i, j))
            scratch_shapes = [pltpu.VMEM((tm, tn), jnp.float32)]
            kernel = _linear_kacc_kernel
            dim_sem = ("parallel", "parallel", "arbitrary")
            est = (2 * (tm * tk * in_item + tk * tn * in_item
                        + tn * 4 + tm * tn * out_item)
                   + tm * tn * 4)

    vmem_limit = int(min(vmem_budget, max(2 * est, 16 * 1024 * 1024)))

    cost = pl.CostEstimate(
        flops=flops,
        transcendentals=0,
        bytes_accessed=(Mp * Kp * in_item + Kp * Np * in_item
                        + Np * 4 + Mp * Np * out_item),
    )

    out_padded = pl.pallas_call(
        kernel,
        out_shape=jax.ShapeDtypeStruct((Mp, Np), out_dtype),
        grid_spec=pltpu.PrefetchScalarGridSpec(
            num_scalar_prefetch=0,
            grid=grid,
            in_specs=in_specs,
            out_specs=out_specs,
            scratch_shapes=scratch_shapes,
        ),
        compiler_params=pltpu.CompilerParams(
            dimension_semantics=dim_sem,
            vmem_limit_bytes=vmem_limit,
        ),
        cost_estimate=cost,
    )(x, w_padded, b_padded)

    if Mp == B and Np == out_f:
        return out_padded
    return out_padded[:B, :out_f]


# --------------------------------------------------------------------------
# Init (matches the module's _initialize_weights: xavier_uniform_, zero bias)
# --------------------------------------------------------------------------
def init_params(key, in_features, out_features):
    """Weight is generated directly in (in_features, out_features) layout (the
    transpose of nn.Linear storage); xavier_uniform_'s bound is symmetric in
    the two dims, so the distribution is identical."""
    bound = math.sqrt(6.0 / (in_features + out_features))
    w_t = jax.random.uniform(
        key, (in_features, out_features), dtype=jnp.float32,
        minval=-bound, maxval=bound,
    )
    bias = jnp.zeros((out_features,), dtype=jnp.float32)
    return w_t, bias


if __name__ == "__main__":
    in_features = 32
    out_features = 16
    batch = 8

    key = jax.random.PRNGKey(0)
    k_x, k_w = jax.random.split(key)

    x = jax.random.normal(k_x, (batch, in_features), dtype=jnp.float32)
    w_t, bias = init_params(k_w, in_features, out_features)

    # --- default bf16 compute path (native MXU rate, f32 accumulation) ---
    wp_bf16, bp = prepare_params(w_t, bias, compute_dtype=jnp.bfloat16)
    out_bf16 = softmax_head_forward(x, wp_bf16, bp, out_features,
                                    compute_dtype=jnp.bfloat16)
    out_bf16 = jax.block_until_ready(out_bf16)

    # --- opt-in f32 compute path (exact) ---
    wp_f32, bp_f32 = prepare_params(w_t, bias, compute_dtype=None)
    out_f32 = softmax_head_forward(x, wp_f32, bp_f32, out_features,
                                   compute_dtype=None)
    out_f32 = jax.block_until_ready(out_f32)

    # References.
    ref = x @ w_t + bias
    ref_bf16 = jnp.dot(x.astype(jnp.bfloat16), w_t.astype(jnp.bfloat16),
                       preferred_element_type=jnp.float32) + bias

    assert out_bf16.shape == (batch, out_features)
    assert out_f32.shape == (batch, out_features)
    assert jnp.allclose(out_f32, ref, atol=1e-5, rtol=1e-5)
    assert jnp.allclose(out_bf16, ref_bf16, atol=2e-3, rtol=2e-3)
    assert jnp.allclose(out_bf16, ref, atol=5e-2, rtol=5e-2)

    print("KERNEL_OK")
</pallas_src>

<mosaic_0001>
module attributes {stable_mosaic.version = 11 : i64} {
  func.func @_linear_kernel(%arg0: i32, %arg1: memref<16x128xbf16, #tpu.memory_space<vmem>>, %arg2: memref<128x128xbf16, #tpu.memory_space<vmem>>, %arg3: memref<1x128xf32, #tpu.memory_space<vmem>>, %arg4: memref<16x128xf32, #tpu.memory_space<vmem>>) attributes {dimension_semantics = [#tpu.dimension_semantics<parallel>], iteration_bounds = array<i64: 1>, scalar_prefetch = 0 : i64, scratch_operands = 0 : i64, tpu.core_type = #tpu.core_type<tc>, window_params = [{transform_indices = @transform_0, window_bounds = array<i64: 16, 128>}, {pipeline_mode = #tpu.pipeline_mode<synchronous>, transform_indices = @transform_1, window_bounds = array<i64: 128, 128>}, {pipeline_mode = #tpu.pipeline_mode<synchronous>, transform_indices = @transform_2, window_bounds = array<i64: 1, 128>}, {transform_indices = @transform_3, window_bounds = array<i64: 16, 128>}]} {
    %c0 = arith.constant 0 : index
    %c0_0 = arith.constant 0 : index
    %0 = vector.load %arg1[%c0, %c0_0] : memref<16x128xbf16, #tpu.memory_space<vmem>>, vector<16x128xbf16>
    %c0_1 = arith.constant 0 : index
    %c0_2 = arith.constant 0 : index
    %1 = vector.load %arg2[%c0_1, %c0_2] : memref<128x128xbf16, #tpu.memory_space<vmem>>, vector<128x128xbf16>
    %cst = arith.constant dense<0.000000e+00> : vector<16x128xf32>
    %2 = tpu.matmul %0, %1, %cst {dimension_numbers = #tpu.dot_dimension_numbers<[1], [0], [0], [1], [0, 0, 1, 1], [], []>} : vector<16x128xbf16>, vector<128x128xbf16>, vector<16x128xf32> -> vector<16x128xf32>
    %c0_3 = arith.constant 0 : index
    %c0_4 = arith.constant 0 : index
    %3 = vector.load %arg3[%c0_3, %c0_4] : memref<1x128xf32, #tpu.memory_space<vmem>>, vector<1x128xf32>
    %4 = vector.broadcast %3 : vector<1x128xf32> to vector<16x128xf32>
    %5 = arith.addf %2, %4 : vector<16x128xf32>
    %c0_5 = arith.constant 0 : index
    %c0_6 = arith.constant 0 : index
    %6 = vector.load %arg4[%c0_5, %c0_6] : memref<16x128xf32, #tpu.memory_space<vmem>>, vector<16x128xf32>
    tpu.vector_store %arg4[%c0_5, %c0_6], %5 {strides = array<i32>} : memref<16x128xf32, #tpu.memory_space<vmem>>, vector<16x128xf32>,
    return
  }
  func.func @transform_0(%arg0: i32) -> (i32, i32) {
    %c0_i32 = arith.constant 0 : i32
    %c0_i32_0 = arith.constant 0 : i32
    return %arg0, %c0_i32 : i32, i32
  }
  func.func @transform_1(%arg0: i32) -> (i32, i32) {
    %c0_i32 = arith.constant 0 : i32
    %c0_i32_0 = arith.constant 0 : i32
    %c0_i32_1 = arith.constant 0 : i32
    return %c0_i32, %c0_i32_0 : i32, i32
  }
  func.func @transform_2(%arg0: i32) -> (i32, i32) {
    %c0_i32 = arith.constant 0 : i32
    %c0_i32_0 = arith.constant 0 : i32
    %c0_i32_1 = arith.constant 0 : i32
    return %c0_i32, %c0_i32_0 : i32, i32
  }
  func.func @transform_3(%arg0: i32) -> (i32, i32) {
    %c0_i32 = arith.constant 0 : i32
    %c0_i32_0 = arith.constant 0 : i32
    return %arg0, %c0_i32 : i32, i32
  }
}

</mosaic_0001>

<llo_original>
// kernel: tpu_custom_call.1
$region0: #{tpu_custom_call.1}
  #allocation0 [shape = 'u32[]', space=smem, size = 0x4, offset = 0x4, fixed_abs, tag = 'smem constant byte address 0x4 - core index']
  #allocation1 [shape = 'u32[144,128]{1,0:T(1,128)}', space=vmem, size = 0x12000, scoped, tag = 'internal scratch']
  %s0 = inlined_call_operand.hbm [shape: bf16[16,128], index: 0, kind: input, shape index: {}]
  %s1 = inlined_call_operand.hbm [shape: bf16[128,128], index: 1, kind: input, shape index: {}]
  %s2 = inlined_call_operand.vmem [shape: f32[1,128], index: 2, kind: input, shape index: {}]
  %s3 = inlined_call_operand.hbm [shape: f32[16,128], index: 3, kind: output, shape index: {}]
  %s4 = sld [smem:[#allocation0]]
  $region30: #{tpu_custom_call.1} parent=0
    _
  %s6 = ssub.s32 1, %s4
  %s7 = scalar_select 0, %s6, %s4
  $region1: #{tpu_custom_call.1} parent=0
    #allocation2 [shape = 'u8[4096]{0}', space=vmem, size = 0x1000, scoped, tag = 'input window, operand 0, single buffered']
    #allocation3 [shape = 's32[1]{0}', space=sflag, size = 0x4, scoped, tag = 'scoped memory for tpu_custom_call.1']
    #allocation4 [shape = 's32[1]{0}', space=sflag, size = 0x4, scoped, tag = 'scoped memory for tpu_custom_call.1']
    #allocation5 [shape = 'u8[32768]{0}', space=vmem, size = 0x8000, scoped, tag = 'input window, operand 1, single buffered']
    #allocation6 [shape = 's32[1]{0}', space=sflag, size = 0x4, scoped, tag = 'scoped memory for tpu_custom_call.1']
    #allocation7 [shape = 'u8[8192]{0}', space=vmem, size = 0x2000, scoped, tag = 'output window, operand 0, single buffered']
    %8 = vsyncpa [#allocation3], 0
    %9 = vsyncpa [#allocation6], 0
    %10 = vsyncpa [#allocation4], 0
    // Predicated region
    $region2: #{tpu_custom_call.1} parent=1 // pred_check
      _
    $region3: #{tpu_custom_call.1} parent=1 // pred_check_branch
      %12 = sbr.rel (0) target = $region5
    $region4: #{tpu_custom_call.1} parent=1 // pred_region
      %s14 = ssub.s32 128, 128
      %15 = vsyncadd [#allocation3], %s14
      %s16 = sshll.u32 [#allocation2], 4
      %s17 = int_to_ptr.vmem [resolvable:$true] %s16
      %22 = dma.hbm_to_vmem [thread:$0]  %s0, 128, %s17, [#allocation3], 64, 64, 4
    $region5: #{tpu_custom_call.1} parent=1 // pred_fallthru
      _
    // Predicated region
    $region6: #{tpu_custom_call.1} parent=1 // pred_check
      _
    $region7: #{tpu_custom_call.1} parent=1 // pred_check_branch
      %24 = sbr.rel (0) target = $region9
    $region8: #{tpu_custom_call.1} parent=1 // pred_region
      %s26 = ssub.s32 1024, 1024
      %27 = vsyncadd [#allocation6], %s26
      %s28 = sshll.u32 [#allocation5], 4
      %s29 = int_to_ptr.vmem [resolvable:$true] %s28
      %34 = dma.hbm_to_vmem [thread:$0]  %s1, 1024, %s29, [#allocation6], 64, 64, 4
    $region9: #{tpu_custom_call.1} parent=1 // pred_fallthru
      _
    // Predicated region
    $region10: #{tpu_custom_call.1} parent=1 // pred_check
      _
    $region11: #{tpu_custom_call.1} parent=1 // pred_check_branch
      %36 = sbr.rel (0) target = $region13
    $region12: #{tpu_custom_call.1} parent=1 // pred_region
      _
    $region13: #{tpu_custom_call.1} parent=1 // pred_fallthru
      _
    // Predicated region
    $region14: #{tpu_custom_call.1} parent=1 // pred_check
      _
    $region15: #{tpu_custom_call.1} parent=1 // pred_check_branch
      %38 = sbr.rel (0) target = $region17
    $region16: #{tpu_custom_call.1} parent=1 // pred_region
      %39 = dma.done [#allocation3], 128
    $region17: #{tpu_custom_call.1} parent=1 // pred_fallthru
      _
    // Predicated region
    $region18: #{tpu_custom_call.1} parent=1 // pred_check
      _
    $region19: #{tpu_custom_call.1} parent=1 // pred_check_branch
      %41 = sbr.rel (0) target = $region21
    $region20: #{tpu_custom_call.1} parent=1 // pred_region
      %42 = dma.done [#allocation6], 1024
    $region21: #{tpu_custom_call.1} parent=1 // pred_fallthru
      _
    %v44 = vld [vmem:[#allocation2] sm:$0xf]
    %v45 = vld [vmem:[#allocation2 + $0x4] sm:$0xf]
    %v46 = vld [vmem:[#allocation5] sm:$0xf]
    %v47 = vld [vmem:[#allocation5 + $0x4] sm:$0xf]
    %v48 = vld [vmem:[#allocation5 + $0x8] sm:$0xf]
    %v49 = vld [vmem:[#allocation5 + $0xc] sm:$0xf]
    %v50 = vld [vmem:[#allocation5 + $0x10] sm:$0xf]
    %v51 = vld [vmem:[#allocation5 + $0x14] sm:$0xf]
    %v52 = vld [vmem:[#allocation5 + $0x18] sm:$0xf]
    %v53 = vld [vmem:[#allocation5 + $0x1c] sm:$0xf]
    %v54 = vld [vmem:[#allocation5 + $0x20] sm:$0xf]
    %v55 = vld [vmem:[#allocation5 + $0x24] sm:$0xf]
    %v56 = vld [vmem:[#allocation5 + $0x28] sm:$0xf]
    %v57 = vld [vmem:[#allocation5 + $0x2c] sm:$0xf]
    %v58 = vld [vmem:[#allocation5 + $0x30] sm:$0xf]
    %v59 = vld [vmem:[#allocation5 + $0x34] sm:$0xf]
    %v60 = vld [vmem:[#allocation5 + $0x38] sm:$0xf]
    %v61 = vld [vmem:[#allocation5 + $0x3c] sm:$0xf]
    %v62 = vld [vmem:[%s2] sm:$0x1]
    %v64 = vlaneseq
    %v65 = vshrl.u32 %v64, 7
    %v66 = vsub.s32 0, %v65
    %v67 = vrot.slane %v62, %v66
    %v71 = vunpack.c.l.b16 %v44
    %v72 = vunpack.c.l.b16 %v45
    %v73 = vpack.c.b16 %v72, %v71
    %v91 = vunpack.c.l.b16 %v46
    %v92 = vunpack.c.l.b16 %v47
    %v93 = vunpack.c.l.b16 %v48
    %v94 = vunpack.c.l.b16 %v49
    %v95 = vunpack.c.l.b16 %v50
    %v96 = vunpack.c.l.b16 %v51
    %v97 = vunpack.c.l.b16 %v52
    %v98 = vunpack.c.l.b16 %v53
    %v99 = vunpack.c.l.b16 %v54
    %v100 = vunpack.c.l.b16 %v55
    %v101 = vunpack.c.l.b16 %v56
    %v102 = vunpack.c.l.b16 %v57
    %v103 = vunpack.c.l.b16 %v58
    %v104 = vunpack.c.l.b16 %v59
    %v105 = vunpack.c.l.b16 %v60
    %v106 = vunpack.c.l.b16 %v61
    %v107 = vpack.c.b16 %v92, %v91
    %v108 = vpack.c.b16 %v94, %v93
    %v109 = vpack.c.b16 %v96, %v95
    %v110 = vpack.c.b16 %v98, %v97
    %v111 = vpack.c.b16 %v100, %v99
    %v112 = vpack.c.b16 %v102, %v101
    %v113 = vpack.c.b16 %v104, %v103
    %v114 = vpack.c.b16 %v106, %v105
    %123 = vmatprep.subr.bf16.mxu0 0
    %124 = vmatpush1.bf16.msra.mxu0 %v107
    %125 = vmatprep.subr.bf16.mxu0 0
    %126 = vmatpush1.bf16.msra.mxu0 %v108
    %127 = vmatprep.subr.bf16.mxu0 0
    %128 = vmatpush1.bf16.msra.mxu0 %v109
    %129 = vmatprep.subr.bf16.mxu0 0
    %130 = vmatpush1.bf16.msra.mxu0 %v110
    %131 = vmatprep.subr.bf16.mxu0 0
    %132 = vmatpush1.bf16.msra.mxu0 %v111
    %133 = vmatprep.subr.bf16.mxu0 0
    %134 = vmatpush1.bf16.msra.mxu0 %v112
    %135 = vmatprep.subr.bf16.mxu0 0
    %136 = vmatpush1.bf16.msra.mxu0 %v113
    %137 = vmatprep.subr.bf16.mxu0 0
    %138 = vmatpush1.bf16.msra.mxu0 %v114
    %139 = vmatprep.subr.bf16.mxu0 0
    %140 = vmatpush1.bf16.msra.mxu0 0
    %141 = vmatprep.subr.bf16.mxu0 0
    %142 = vmatpush1.bf16.msra.mxu0 0
    %143 = vmatprep.subr.bf16.mxu0 0
    %144 = vmatpush1.bf16.msra.mxu0 0
    %145 = vmatprep.subr.bf16.mxu0 0
    %146 = vmatpush1.bf16.msra.mxu0 0
    %147 = vmatprep.subr.bf16.mxu0 0
    %148 = vmatpush1.bf16.msra.mxu0 0
    %149 = vmatprep.subr.bf16.mxu0 0
    %150 = vmatpush1.bf16.msra.mxu0 0
    %151 = vmatprep.subr.bf16.mxu0 0
    %152 = vmatpush1.bf16.msra.mxu0 0
    %153 = vmatprep.subr.bf16.mxu0 0
    %154 = vmatpush1.bf16.msra.mxu0 0
    %155 = vmatprep.mubr.bf16.mxu0 0
    %156 = vmatmul.mubr.bf16.gmra.mrb[0].mxu0 %v73
    %v157 = vpop.f32.mrb[0].mxu0
    %v158 = vadd.f32 %v67, %v157
    %v159 = vpop.f32.mrb[0].mxu0
    %v160 = vpop.f32.mrb[0].mxu0
    %v161 = vadd.f32 %v67, %v160
    %v162 = vpop.f32.mrb[0].mxu0
    %163 = vdwg.mxu0
    %164 = vst [vmem:[#allocation7] sm:$0xff] %v158
    %165 = vst [vmem:[#allocation7 + $0x8] sm:$0xff] %v161
    // Predicated region
    $region22: #{tpu_custom_call.1} parent=1 // pred_check
      _
    $region23: #{tpu_custom_call.1} parent=1 // pred_check_branch
      %167 = sbr.rel (0) target = $region25
    $region24: #{tpu_custom_call.1} parent=1 // pred_region
      %s169 = ssub.s32 256, 256
      %170 = vsyncadd [#allocation4], %s169
      %s171 = sshll.u32 [#allocation7], 4
      %s172 = int_to_ptr.vmem [resolvable:$true] %s171
      %177 = dma.vmem_to_hbm [thread:$0]  %s172, 256, %s3, [#allocation4], 128, 128, 8
    $region25: #{tpu_custom_call.1} parent=1 // pred_fallthru
      _
    // Predicated region
    $region26: #{tpu_custom_call.1} parent=1 // pred_check
      _
    $region27: #{tpu_custom_call.1} parent=1 // pred_check_branch
      %179 = sbr.rel (0) target = $region29
    $region28: #{tpu_custom_call.1} parent=1 // pred_region
      %180 = dma.done [#allocation4], 256
    $region29: #{tpu_custom_call.1} parent=1 // pred_fallthru
      _
    %181 = vsyncpa [#allocation3], 1
    %182 = vsyncpa [#allocation6], 1
    %183 = vsyncpa [#allocation4], 1

</llo_original>
